<compile_context>
chip_gen: v7x
topology: tpu7x:2x2x1
jax: 0.10.0
libtpu: 0.0.40
codegen_flags: <defaults>
</compile_context>

<pallas_src>
import functools
import math

import jax
import jax.numpy as jnp
from jax.experimental import pallas as pl
from jax.experimental.pallas import tpu as pltpu


def _round_up(n, m):
    return -(-n // m) * m


def _padded_tile_bytes(rows, cols, itemsize):
    """VMEM footprint of a (rows, cols) block after (8, 128) sublane/lane padding."""
    return _round_up(rows, 8) * _round_up(cols, 128) * itemsize


def _nbytes(a):
    return math.prod(a.shape) * a.dtype.itemsize


def reward_kernel(xs_ref, xa_ref, ws_ref, wa_ref, bin_ref, w1_ref, b1_ref,
                  w2_ref, b2_ref, out_ref):
    """One batch tile.  P batch rows are lane-packed per VMEM row.

    xs_ref : (tile_p, P*Ds) f32      ws_ref : (P*Ds, P*2H) mxu_dtype
    xa_ref : (tile_p, P*Da) f32      wa_ref : (P*Da, P*2H) mxu_dtype
    bin_ref: (1, P*2H)     f32       w1_ref : (P*2H, P*8)  mxu_dtype
    b1_ref : (1, P*8)      f32       w2_ref : (P*8, P)     mxu_dtype
    b2_ref : (1, 1)        f32 in SMEM
    out_ref: (tile_p, P)   f32       (row-major flatten == batch order)
    """
    mxu_dtype = ws_ref.dtype

    # Layer 1: fused state + action branches (block-diag packed weights).
    z = jnp.dot(xs_ref[...].astype(mxu_dtype), ws_ref[...],
                preferred_element_type=jnp.float32)
    z = z + jnp.dot(xa_ref[...].astype(mxu_dtype), wa_ref[...],
                    preferred_element_type=jnp.float32)
    z = jnp.maximum(z + bin_ref[...], 0.0)           # f32 epilogue (v5e: no bf16 VPU)

    # Layer 2: (concat hidden) @ W1 + b1, ReLU.
    h = jnp.dot(z.astype(mxu_dtype), w1_ref[...], preferred_element_type=jnp.float32)
    h = jnp.maximum(h + b1_ref[...], 0.0)

    # Head: 8 -> 1 per packed batch row, + scalar bias from SMEM.
    o = jnp.dot(h.astype(mxu_dtype), w2_ref[...], preferred_element_type=jnp.float32)
    out_ref[...] = (o + b2_ref[0, 0]).astype(out_ref.dtype)


def init_params(key, state_dim, action_dim, hidden_dim=100, output_dim=1):
    """Raw (PyTorch-equivalent) params, nn.Linear-style U(-1/sqrt(fan_in), +) init."""
    assert output_dim == 1, "RewardModel head is reshape(-1, 1); output_dim must be 1"

    def linear(k, fan_in, fan_out):
        kw, kb = jax.random.split(k)
        bound = 1.0 / math.sqrt(fan_in)
        w = jax.random.uniform(kw, (fan_in, fan_out), jnp.float32, -bound, bound)
        b = jax.random.uniform(kb, (1, fan_out), jnp.float32, -bound, bound)
        return w, b

    k1, k2, k3, k4 = jax.random.split(key, 4)
    ws, bs = linear(k1, state_dim, hidden_dim)        # state_processor Linear
    wa, ba = linear(k2, action_dim, hidden_dim)       # action_processor Linear
    w1, b1 = linear(k3, 2 * hidden_dim, 8)            # output_layer Linear #1
    w2, b2 = linear(k4, 8, output_dim)                # output_layer Linear #2
    return (ws, bs, wa, ba, w1, b1, w2, b2)


def pack_params(raw_params, *, pack=8, mxu_dtype=jnp.bfloat16):
    """Lane-pack weights: replicate each layer block-diagonally `pack` times so that
    `pack` batch rows can share one VMEM row.  Weights are tiny (not B-scaled)."""
    ws, bs, wa, ba, w1, b1, w2, b2 = raw_params
    ds, h = ws.shape
    da = wa.shape[0]
    h2, k8 = w1.shape
    assert h2 == 2 * h and w2.shape == (k8, 1)

    eye = jnp.eye(pack, dtype=jnp.float32)
    ws_blk = jnp.concatenate([ws, jnp.zeros((ds, h), jnp.float32)], axis=1)   # (ds, 2H)
    wa_blk = jnp.concatenate([jnp.zeros((da, h), jnp.float32), wa], axis=1)   # (da, 2H)
    ws_p = jnp.kron(eye, ws_blk).astype(mxu_dtype)     # (P*ds, P*2H)
    wa_p = jnp.kron(eye, wa_blk).astype(mxu_dtype)     # (P*da, P*2H)
    w1_p = jnp.kron(eye, w1).astype(mxu_dtype)         # (P*2H, P*8)
    w2_p = jnp.kron(eye, w2).astype(mxu_dtype)         # (P*8,  P)
    bin_p = jnp.tile(jnp.concatenate([bs, ba], axis=1), (1, pack)).astype(jnp.float32)
    b1_p = jnp.tile(b1, (1, pack)).astype(jnp.float32)
    b2_s = jnp.asarray(b2, jnp.float32).reshape(1, 1)
    return (ws_p, wa_p, bin_p, w1_p, b1_p, w2_p, b2_s)


@functools.partial(jax.jit, static_argnames=("tile_b",))
def reward_model_forward(sx, ax, packed_params, *, tile_b=8192):
    """Pallas forward.  sx: [B, state_dim], ax: [B, action_dim] -> [B, 1] float32."""
    ws_p, wa_p, bin_p, w1_p, b1_p, w2_p, b2 = packed_params
    P = w2_p.shape[1]
    ds_p, h2_p = ws_p.shape          # P*Ds, P*2H
    da_p = wa_p.shape[0]             # P*Da
    k_p = w1_p.shape[1]              # P*8
    ds, da = ds_p // P, da_p // P

    B = sx.shape[0]
    st = sx.reshape(B, -1)           # mirrors sx.view(batch_size, -1)
    ac = ax.reshape(B, -1)           # mirrors ax.view(batch_size, -1)
    assert st.shape[1] == ds and ac.shape[1] == da

    # Lane-pack P batch rows per HBM row.  For B % P == 0 these reshapes are free
    # bitcasts of the contiguous arrays (no extra HBM pass); only a ragged batch pays
    # a small pad copy (< P rows appended).
    b_rows = _round_up(B, P)
    if b_rows != B:
        st = jnp.pad(st, ((0, b_rows - B), (0, 0)))
        ac = jnp.pad(ac, ((0, b_rows - B), (0, 0)))
    bp = b_rows // P
    xs = st.reshape(bp, P * ds)      # (Bp, P*Ds)  lane-dense rows
    xa = ac.reshape(bp, P * da)      # (Bp, P*Da)

    # Packed-row tile size: as large as the VMEM budget allows (per-grid-step fixed
    # cost ~0.35us), but keep >=2 grid steps so v7x's two TensorCores both get work.
    tile_p = max(8, min((tile_b // P // 8) * 8, _round_up(pl.cdiv(bp, 2), 8)))

    def vmem_estimate(tp):
        est = 0
        # double-buffered streamed blocks: xs, xa, out
        est += 2 * (_padded_tile_bytes(tp, P * ds, 4)
                    + _padded_tile_bytes(tp, P * da, 4)
                    + _padded_tile_bytes(tp, P, 4))
        # resident weights / biases (count buffer pairs conservatively)
        for w in (ws_p, wa_p, w1_p, w2_p, bin_p, b1_p):
            est += 2 * _padded_tile_bytes(w.shape[0], w.shape[1], w.dtype.itemsize)
        # f32 intermediates z, h (+ MXU accumulator headroom)
        est += 2 * (_padded_tile_bytes(tp, h2_p, 4) + _padded_tile_bytes(tp, k_p, 4))
        return est

    VMEM_BUDGET = 20 * 1024 * 1024   # lane-padded estimate; safe for v7x 32MiB scoped
    while tile_p > 8 and vmem_estimate(tile_p) > VMEM_BUDGET:
        tile_p = max(8, _round_up(tile_p // 2, 8))

    num_tiles = pl.cdiv(bp, tile_p)
    # Output allocation is padded to whole tiles (no reliance on masked OOB writes);
    # the ragged last *input* block is handled by Pallas' clamped block DMA -- rows are
    # independent, so garbage pad rows only produce garbage pad outputs (sliced off).
    out_rows = num_tiles * tile_p

    cost = pl.CostEstimate(
        flops=2 * out_rows * (ds_p * h2_p + da_p * h2_p + h2_p * k_p + k_p * P),
        transcendentals=0,
        bytes_accessed=(_nbytes(xs) + _nbytes(xa) + 4 * out_rows * P
                        + sum(_nbytes(w) for w in (ws_p, wa_p, bin_p, w1_p, b1_p, w2_p, b2))),
    )

    out_packed = pl.pallas_call(
        reward_kernel,
        out_shape=jax.ShapeDtypeStruct((out_rows, P), jnp.float32),
        grid=(num_tiles,),
        in_specs=[
            pl.BlockSpec((tile_p, P * ds), lambda i: (i, 0)),   # xs: streamed over batch
            pl.BlockSpec((tile_p, P * da), lambda i: (i, 0)),   # xa: streamed over batch
            pl.BlockSpec((ds_p, h2_p), lambda i: (0, 0)),       # WsP (resident)
            pl.BlockSpec((da_p, h2_p), lambda i: (0, 0)),       # WaP (resident)
            pl.BlockSpec((1, h2_p), lambda i: (0, 0)),          # packed [bs|ba] bias
            pl.BlockSpec((h2_p, k_p), lambda i: (0, 0)),        # W1P (resident)
            pl.BlockSpec((1, k_p), lambda i: (0, 0)),           # b1P
            pl.BlockSpec((k_p, P), lambda i: (0, 0)),           # W2P (resident)
            pl.BlockSpec(memory_space=pltpu.MemorySpace.SMEM),  # b2 scalar in SMEM
        ],
        out_specs=pl.BlockSpec((tile_p, P), lambda i: (i, 0)),
        compiler_params=pltpu.CompilerParams(
            dimension_semantics=("parallel",),     # shard batch grid across TCs (v7x)
            vmem_limit_bytes=32 * 1024 * 1024,     # >= estimate, safe on v5e/v6e/v7x
        ),
        cost_estimate=cost,
    )(xs, xa, ws_p, wa_p, bin_p, w1_p, b1_p, w2_p, b2)

    # Row-major flatten of (out_rows, P) is exactly batch order (row r, lane i -> P*r+i).
    return out_packed.reshape(-1, 1)[:B]


def reward_model_reference(sx, ax, raw_params):
    """Pure-JAX f32 reference of the eval-mode PyTorch forward (dropout == identity)."""
    ws, bs, wa, ba, w1, b1, w2, b2 = raw_params
    B = sx.shape[0]
    st = sx.reshape(B, -1)
    ac = ax.reshape(B, -1)
    s = jnp.maximum(st @ ws + bs, 0.0)
    a = jnp.maximum(ac @ wa + ba, 0.0)
    h = jnp.maximum(jnp.concatenate([s, a], axis=1) @ w1 + b1, 0.0)
    return (h @ w2 + b2).reshape(-1, 1)


if __name__ == "__main__":
    batch = 200            # multiple of 8 (free lane-pack reshape), not of tile -> ragged block
    state_dim = 16
    action_dim = 8
    hidden_dim = 32
    output_dim = 1

    key = jax.random.PRNGKey(0)
    k_sx, k_ax, k_params = jax.random.split(key, 3)

    sx = jax.random.normal(k_sx, (batch, state_dim), jnp.float32)
    ax = jax.random.normal(k_ax, (batch, action_dim), jnp.float32)

    raw = init_params(k_params, state_dim, action_dim, hidden_dim, output_dim)
    packed = pack_params(raw)                     # bf16 MXU operands, f32 biases

    out = reward_model_forward(sx, ax, packed)    # tile auto-capped to >=2 grid steps
    jax.block_until_ready(out)

    # Validate against the true f32 semantics built from the ORIGINAL (unpacked) weights;
    # tolerance covers the bf16 MXU-operand cast (pass mxu_dtype=jnp.float32 for exact).
    ref = reward_model_reference(sx, ax, raw)
    assert out.shape == (batch, 1)
    max_err = float(jnp.max(jnp.abs(out - ref)))
    assert jnp.allclose(out, ref, atol=3e-2, rtol=3e-2), max_err
    print("KERNEL_OK")
</pallas_src>

<mosaic_0001>
module attributes {stable_mosaic.version = 11 : i64} {
  func.func @reward_kernel(%arg0: i32, %arg1: memref<16x128xf32, #tpu.memory_space<vmem>>, %arg2: memref<16x64xf32, #tpu.memory_space<vmem>>, %arg3: memref<128x512xbf16, #tpu.memory_space<vmem>>, %arg4: memref<64x512xbf16, #tpu.memory_space<vmem>>, %arg5: memref<1x512xf32, #tpu.memory_space<vmem>>, %arg6: memref<512x64xbf16, #tpu.memory_space<vmem>>, %arg7: memref<1x64xf32, #tpu.memory_space<vmem>>, %arg8: memref<64x8xbf16, #tpu.memory_space<vmem>>, %arg9: memref<1x1xf32, #tpu.memory_space<smem>>, %arg10: memref<16x8xf32, #tpu.memory_space<vmem>>) attributes {dimension_semantics = [#tpu.dimension_semantics<parallel>], iteration_bounds = array<i64: 2>, scalar_prefetch = 0 : i64, scratch_operands = 0 : i64, tpu.core_type = #tpu.core_type<tc>, window_params = [{transform_indices = @transform_0, window_bounds = array<i64: 16, 128>}, {transform_indices = @transform_1, window_bounds = array<i64: 16, 64>}, {pipeline_mode = #tpu.pipeline_mode<synchronous>, transform_indices = @transform_2, window_bounds = array<i64: 128, 512>}, {pipeline_mode = #tpu.pipeline_mode<synchronous>, transform_indices = @transform_3, window_bounds = array<i64: 64, 512>}, {pipeline_mode = #tpu.pipeline_mode<synchronous>, transform_indices = @transform_4, window_bounds = array<i64: 1, 512>}, {pipeline_mode = #tpu.pipeline_mode<synchronous>, transform_indices = @transform_5, window_bounds = array<i64: 512, 64>}, {pipeline_mode = #tpu.pipeline_mode<synchronous>, transform_indices = @transform_6, window_bounds = array<i64: 1, 64>}, {pipeline_mode = #tpu.pipeline_mode<synchronous>, transform_indices = @transform_7, window_bounds = array<i64: 64, 8>}, {transform_indices = @transform_8, window_bounds = array<i64: 1, 1>}, {transform_indices = @transform_9, window_bounds = array<i64: 16, 8>}]} {
    %c0 = arith.constant 0 : index
    %c0_0 = arith.constant 0 : index
    %0 = vector.load %arg1[%c0, %c0_0] : memref<16x128xf32, #tpu.memory_space<vmem>>, vector<16x128xf32>
    %1 = arith.truncf %0 : vector<16x128xf32> to vector<16x128xbf16>
    %c0_1 = arith.constant 0 : index
    %c0_2 = arith.constant 0 : index
    %2 = vector.load %arg3[%c0_1, %c0_2] : memref<128x512xbf16, #tpu.memory_space<vmem>>, vector<128x512xbf16>
    %cst = arith.constant dense<0.000000e+00> : vector<16x512xf32>
    %3 = tpu.matmul %1, %2, %cst {dimension_numbers = #tpu.dot_dimension_numbers<[1], [0], [0], [1], [0, 0, 1, 1], [], []>} : vector<16x128xbf16>, vector<128x512xbf16>, vector<16x512xf32> -> vector<16x512xf32>
    %c0_3 = arith.constant 0 : index
    %c0_4 = arith.constant 0 : index
    %4 = vector.load %arg2[%c0_3, %c0_4] : memref<16x64xf32, #tpu.memory_space<vmem>>, vector<16x64xf32>
    %5 = arith.truncf %4 : vector<16x64xf32> to vector<16x64xbf16>
    %c0_5 = arith.constant 0 : index
    %c0_6 = arith.constant 0 : index
    %6 = vector.load %arg4[%c0_5, %c0_6] : memref<64x512xbf16, #tpu.memory_space<vmem>>, vector<64x512xbf16>
    %cst_7 = arith.constant dense<0.000000e+00> : vector<16x512xf32>
    %7 = tpu.matmul %5, %6, %cst_7 {dimension_numbers = #tpu.dot_dimension_numbers<[1], [0], [0], [1], [0, 0, 1, 1], [], []>} : vector<16x64xbf16>, vector<64x512xbf16>, vector<16x512xf32> -> vector<16x512xf32>
    %8 = arith.addf %3, %7 : vector<16x512xf32>
    %c0_8 = arith.constant 0 : index
    %c0_9 = arith.constant 0 : index
    %9 = vector.load %arg5[%c0_8, %c0_9] : memref<1x512xf32, #tpu.memory_space<vmem>>, vector<1x512xf32>
    %10 = vector.broadcast %9 : vector<1x512xf32> to vector<16x512xf32>
    %11 = arith.addf %8, %10 : vector<16x512xf32>
    %cst_10 = arith.constant 0.000000e+00 : f32
    %12 = vector.broadcast %cst_10 : f32 to vector<16x512xf32>
    %13 = arith.maximumf %11, %12 : vector<16x512xf32>
    %14 = arith.truncf %13 : vector<16x512xf32> to vector<16x512xbf16>
    %c0_11 = arith.constant 0 : index
    %c0_12 = arith.constant 0 : index
    %15 = vector.load %arg6[%c0_11, %c0_12] : memref<512x64xbf16, #tpu.memory_space<vmem>>, vector<512x64xbf16>
    %cst_13 = arith.constant dense<0.000000e+00> : vector<16x64xf32>
    %16 = tpu.matmul %14, %15, %cst_13 {dimension_numbers = #tpu.dot_dimension_numbers<[1], [0], [0], [1], [0, 0, 1, 1], [], []>} : vector<16x512xbf16>, vector<512x64xbf16>, vector<16x64xf32> -> vector<16x64xf32>
    %c0_14 = arith.constant 0 : index
    %c0_15 = arith.constant 0 : index
    %17 = vector.load %arg7[%c0_14, %c0_15] : memref<1x64xf32, #tpu.memory_space<vmem>>, vector<1x64xf32>
    %18 = vector.broadcast %17 : vector<1x64xf32> to vector<16x64xf32>
    %19 = arith.addf %16, %18 : vector<16x64xf32>
    %cst_16 = arith.constant 0.000000e+00 : f32
    %20 = vector.broadcast %cst_16 : f32 to vector<16x64xf32>
    %21 = arith.maximumf %19, %20 : vector<16x64xf32>
    %22 = arith.truncf %21 : vector<16x64xf32> to vector<16x64xbf16>
    %c0_17 = arith.constant 0 : index
    %c0_18 = arith.constant 0 : index
    %23 = vector.load %arg8[%c0_17, %c0_18] : memref<64x8xbf16, #tpu.memory_space<vmem>>, vector<64x8xbf16>
    %cst_19 = arith.constant dense<0.000000e+00> : vector<16x8xf32>
    %24 = tpu.matmul %22, %23, %cst_19 {dimension_numbers = #tpu.dot_dimension_numbers<[1], [0], [0], [1], [0, 0, 1, 1], [], []>} : vector<16x64xbf16>, vector<64x8xbf16>, vector<16x8xf32> -> vector<16x8xf32>
    %c0_20 = arith.constant 0 : index
    %c0_21 = arith.constant 0 : index
    %25 = memref.load %arg9[%c0_20, %c0_21] : memref<1x1xf32, #tpu.memory_space<smem>>
    %26 = vector.broadcast %25 : f32 to vector<16x8xf32>
    %27 = arith.addf %24, %26 : vector<16x8xf32>
    %c0_22 = arith.constant 0 : index
    %c0_23 = arith.constant 0 : index
    %28 = vector.load %arg10[%c0_22, %c0_23] : memref<16x8xf32, #tpu.memory_space<vmem>>, vector<16x8xf32>
    tpu.vector_store %arg10[%c0_22, %c0_23], %27 {strides = array<i32>} : memref<16x8xf32, #tpu.memory_space<vmem>>, vector<16x8xf32>,
    return
  }
  func.func @transform_0(%arg0: i32) -> (i32, i32) {
    %c0_i32 = arith.constant 0 : i32
    %c0_i32_0 = arith.constant 0 : i32
    return %arg0, %c0_i32 : i32, i32
  }
  func.func @transform_1(%arg0: i32) -> (i32, i32) {
    %c0_i32 = arith.constant 0 : i32
    %c0_i32_0 = arith.constant 0 : i32
    return %arg0, %c0_i32 : i32, i32
  }
  func.func @transform_2(%arg0: i32) -> (i32, i32) {
    %c0_i32 = arith.constant 0 : i32
    %c0_i32_0 = arith.constant 0 : i32
    %c0_i32_1 = arith.constant 0 : i32
    return %c0_i32, %c0_i32_0 : i32, i32
  }
  func.func @transform_3(%arg0: i32) -> (i32, i32) {
    %c0_i32 = arith.constant 0 : i32
    %c0_i32_0 = arith.constant 0 : i32
    %c0_i32_1 = arith.constant 0 : i32
    return %c0_i32, %c0_i32_0 : i32, i32
  }
  func.func @transform_4(%arg0: i32) -> (i32, i32) {
    %c0_i32 = arith.constant 0 : i32
    %c0_i32_0 = arith.constant 0 : i32
    %c0_i32_1 = arith.constant 0 : i32
    return %c0_i32, %c0_i32_0 : i32, i32
  }
  func.func @transform_5(%arg0: i32) -> (i32, i32) {
    %c0_i32 = arith.constant 0 : i32
    %c0_i32_0 = arith.constant 0 : i32
    %c0_i32_1 = arith.constant 0 : i32
    return %c0_i32, %c0_i32_0 : i32, i32
  }
  func.func @transform_6(%arg0: i32) -> (i32, i32) {
    %c0_i32 = arith.constant 0 : i32
    %c0_i32_0 = arith.constant 0 : i32
    %c0_i32_1 = arith.constant 0 : i32
    return %c0_i32, %c0_i32_0 : i32, i32
  }
  func.func @transform_7(%arg0: i32) -> (i32, i32) {
    %c0_i32 = arith.constant 0 : i32
    %c0_i32_0 = arith.constant 0 : i32
    %c0_i32_1 = arith.constant 0 : i32
    return %c0_i32, %c0_i32_0 : i32, i32
  }
  func.func @transform_8(%arg0: i32) -> (i32, i32) {
    %c0_i32 = arith.constant 0 : i32
    %c0_i32_0 = arith.constant 0 : i32
    %c0_i32_1 = arith.constant 0 : i32
    return %c0_i32, %c0_i32_0 : i32, i32
  }
  func.func @transform_9(%arg0: i32) -> (i32, i32) {
    %c0_i32 = arith.constant 0 : i32
    %c0_i32_0 = arith.constant 0 : i32
    return %arg0, %c0_i32 : i32, i32
  }
}

</mosaic_0001>

<llo_original>
// kernel: reward_model_forward.1
$region0: #{reward_model_forward.1}
  #allocation0 [shape = 'u32[]', space=smem, size = 0x4, offset = 0x4, fixed_abs, tag = 'smem constant byte address 0x4 - core index']
  #allocation1 [shape = 'u32[144,128]{1,0:T(1,128)}', space=vmem, size = 0x12000, scoped, tag = 'internal scratch']
  #allocation2 [shape = 'f32[1,1]{1,0:T(1,128)S(6)}', space=smem, size = 0x200, scoped, tag = 'scoped memory for reward_model_forward.1']
  %s0 = inlined_call_operand.vmem [shape: f32[25,128], index: 0, kind: input, shape index: {}]
  %s1 = inlined_call_operand.vmem [shape: f32[25,64], index: 1, kind: input, shape index: {}]
  %s2 = inlined_call_operand.vmem [shape: bf16[128,512], index: 2, kind: input, shape index: {}]
  %s3 = inlined_call_operand.vmem [shape: bf16[64,512], index: 3, kind: input, shape index: {}]
  %s4 = inlined_call_operand.vmem [shape: f32[1,512], index: 4, kind: input, shape index: {}]
  %s5 = inlined_call_operand.vmem [shape: bf16[512,64], index: 5, kind: input, shape index: {}]
  %s6 = inlined_call_operand.vmem [shape: f32[1,64], index: 6, kind: input, shape index: {}]
  %s7 = inlined_call_operand.vmem [shape: bf16[64,8], index: 7, kind: input, shape index: {}]
  %s8 = inlined_call_operand.<no memory space> [shape: f32[1,1], index: 8, kind: input, shape index: {}]
  %s9 = inlined_call_operand.vmem [shape: f32[32,8], index: 9, kind: output, shape index: {}]
  %s10 = sld [smem:[#allocation0]]
  $region69: #{reward_model_forward.1} parent=0
    _
  %s12 = ssub.s32 1, %s10
  %s13 = scalar_select 0, %s12, %s10
  %14 = sst [smem:[#allocation2]] %s8
  loop: start=0, step=1, limit=4
  $region2: #{reward_model_forward.1} parent=0 // loop_pre_header
    _
  $region3: #{reward_model_forward.1} parent=0 // loop_header
    %s16 = sphi 0, %s20
    %p17 = scmp.ge.s32.totalorder %s16, 4
    %s26 = sphi 0, %s28
    %s29 = sphi 0, %s26
    %s30 = sphi 0, %s29
    %s46 = sphi 0, %s30
    %s52 = sphi 0, %s54
    %s55 = sphi 0, %s52
    %s56 = sphi 0, %s55
    %s72 = sphi 0, %s56
    %s76 = sphi 0, %s76
    %s78 = sphi 0, %s76
    %s79 = sphi 0, %s78
    %s93 = sphi 0, %s79
    %s97 = sphi 0, %s97
    %s99 = sphi 0, %s97
    %s100 = sphi 0, %s99
    %s114 = sphi 0, %s100
    %s118 = sphi 0, %s118
    %s120 = sphi 0, %s118
    %s121 = sphi 0, %s120
    %s135 = sphi 0, %s121
    %s139 = sphi 0, %s139
    %s141 = sphi 0, %s139
    %s142 = sphi 0, %s141
    %s156 = sphi 0, %s142
    %s160 = sphi 0, %s160
    %s162 = sphi 0, %s160
    %s163 = sphi 0, %s162
    %s177 = sphi 0, %s163
    %s181 = sphi 0, %s181
    %s183 = sphi 0, %s181
    %s184 = sphi 0, %s183
    %s198 = sphi 0, %s184
    %s202 = sphi 0, %s202
    %s204 = sphi 0, %s202
    %s205 = sphi 0, %s204
    %s219 = sphi 0, %s205
    %s225 = sphi 0, %s227
    %s228 = sphi 0, %s225
    %s229 = sphi 0, %s228
    %s245 = sphi 0, %s229
  $region4: #{reward_model_forward.1} parent=0 // loop_header_branch
    %19 = sbr.rel (%p17) target = $region8
  $region5: #{reward_model_forward.1} parent=0 // loop_body
    %s21 = ssub.s32 %s16, 1
    %s22 = ssub.s32 %s16, 2
    %s23 = sadd.s32 %s16, 1
    %s24 = ssub.s32 %s16, %s23
    %p25 = scmp.eq.s32.totalorder %s24, 0
    %s27 = sadd.s32 %s26, 1
    %s28 = scalar_select %p25, %s26, %s27
    %p31 = pneg %p25
    %p32 = scmp.eq.s32.totalorder %s16, 1
    %p33 = por %p31, %p32
    %p34 = scmp.ne.s32.totalorder %s26, %s29
    %p35 = scmp.eq.s32.totalorder %s16, 0
    %p36 = por %p34, %p35
    %p37 = scmp.ne.s32.totalorder %s26, %s29
    %p38 = scmp.eq.s32.totalorder %s21, 1
    %p39 = por %p37, %p38
    %p40 = scmp.ne.s32.totalorder %s29, %s30
    %p41 = scmp.eq.s32.totalorder %s21, 0
    %p42 = por %p40, %p41
    %p43 = scmp.ne.s32.totalorder %s29, %s30
    %p44 = scmp.eq.s32.totalorder %s22, 1
    %p45 = por %p43, %p44
    %p47 = scmp.ne.s32.totalorder %s30, %s46
    %p48 = scmp.eq.s32.totalorder %s22, 0
    %p49 = por %p47, %p48
    %s50 = ssub.s32 %s16, %s23
    %p51 = scmp.eq.s32.totalorder %s50, 0
    %s53 = sadd.s32 %s52, 1
    %s54 = scalar_select %p51, %s52, %s53
    %p57 = pneg %p51
    %p58 = scmp.eq.s32.totalorder %s16, 1
    %p59 = por %p57, %p58
    %p60 = scmp.ne.s32.totalorder %s52, %s55
    %p61 = scmp.eq.s32.totalorder %s16, 0
    %p62 = por %p60, %p61
    %p63 = scmp.ne.s32.totalorder %s52, %s55
    %p64 = scmp.eq.s32.totalorder %s21, 1
    %p65 = por %p63, %p64
    %p66 = scmp.ne.s32.totalorder %s55, %s56
    %p67 = scmp.eq.s32.totalorder %s21, 0
    %p68 = por %p66, %p67
    %p69 = scmp.ne.s32.totalorder %s55, %s56
    %p70 = scmp.eq.s32.totalorder %s22, 1
    %p71 = por %p69, %p70
    %p73 = scmp.ne.s32.totalorder %s56, %s72
    %p74 = scmp.eq.s32.totalorder %s22, 0
    %p75 = por %p73, %p74
    %s77 = sadd.s32 %s76, 1
    %p80 = scmp.eq.s32.totalorder %s16, 1
    %p81 = scmp.ne.s32.totalorder %s76, %s78
    %p82 = scmp.eq.s32.totalorder %s16, 0
    %p83 = por %p81, %p82
    %p84 = scmp.ne.s32.totalorder %s76, %s78
    %p85 = scmp.eq.s32.totalorder %s21, 1
    %p86 = por %p84, %p85
    %p87 = scmp.ne.s32.totalorder %s78, %s79
    %p88 = scmp.eq.s32.totalorder %s21, 0
    %p89 = por %p87, %p88
    %p90 = scmp.ne.s32.totalorder %s78, %s79
    %p91 = scmp.eq.s32.totalorder %s22, 1
    %p92 = por %p90, %p91
    %p94 = scmp.ne.s32.totalorder %s79, %s93
    %p95 = scmp.eq.s32.totalorder %s22, 0
    %p96 = por %p94, %p95
    %s98 = sadd.s32 %s97, 1
    %p101 = scmp.eq.s32.totalorder %s16, 1
    %p102 = scmp.ne.s32.totalorder %s97, %s99
    %p103 = scmp.eq.s32.totalorder %s16, 0
    %p104 = por %p102, %p103
    %p105 = scmp.ne.s32.totalorder %s97, %s99
    %p106 = scmp.eq.s32.totalorder %s21, 1
    %p107 = por %p105, %p106
    %p108 = scmp.ne.s32.totalorder %s99, %s100
    %p109 = scmp.eq.s32.totalorder %s21, 0
    %p110 = por %p108, %p109
    %p111 = scmp.ne.s32.totalorder %s99, %s100
    %p112 = scmp.eq.s32.totalorder %s22, 1
    %p113 = por %p111, %p112
    %p115 = scmp.ne.s32.totalorder %s100, %s114
    %p116 = scmp.eq.s32.totalorder %s22, 0
    %p117 = por %p115, %p116
    %s119 = sadd.s32 %s118, 1
    %p122 = scmp.eq.s32.totalorder %s16, 1
    %p123 = scmp.ne.s32.totalorder %s118, %s120
    %p124 = scmp.eq.s32.totalorder %s16, 0
    %p125 = por %p123, %p124
    %p126 = scmp.ne.s32.totalorder %s118, %s120
    %p127 = scmp.eq.s32.totalorder %s21, 1
    %p128 = por %p126, %p127
    %p129 = scmp.ne.s32.totalorder %s120, %s121
    %p130 = scmp.eq.s32.totalorder %s21, 0
    %p131 = por %p129, %p130
    %p132 = scmp.ne.s32.totalorder %s120, %s121
    %p133 = scmp.eq.s32.totalorder %s22, 1
    %p134 = por %p132, %p133
    %p136 = scmp.ne.s32.totalorder %s121, %s135
    %p137 = scmp.eq.s32.totalorder %s22, 0
    %p138 = por %p136, %p137
    %s140 = sadd.s32 %s139, 1
    %p143 = scmp.eq.s32.totalorder %s16, 1
    %p144 = scmp.ne.s32.totalorder %s139, %s141
    %p145 = scmp.eq.s32.totalorder %s16, 0
    %p146 = por %p144, %p145
    %p147 = scmp.ne.s32.totalorder %s139, %s141
    %p148 = scmp.eq.s32.totalorder %s21, 1
    %p149 = por %p147, %p148
    %p150 = scmp.ne.s32.totalorder %s141, %s142
    %p151 = scmp.eq.s32.totalorder %s21, 0
    %p152 = por %p150, %p151
    %p153 = scmp.ne.s32.totalorder %s141, %s142
    %p154 = scmp.eq.s32.totalorder %s22, 1
    %p155 = por %p153, %p154
    %p157 = scmp.ne.s32.totalorder %s142, %s156
    %p158 = scmp.eq.s32.totalorder %s22, 0
    %p159 = por %p157, %p158
    %s161 = sadd.s32 %s160, 1
    %p164 = scmp.eq.s32.totalorder %s16, 1
    %p165 = scmp.ne.s32.totalorder %s160, %s162
    %p166 = scmp.eq.s32.totalorder %s16, 0
    %p167 = por %p165, %p166
    %p168 = scmp.ne.s32.totalorder %s160, %s162
    %p169 = scmp.eq.s32.totalorder %s21, 1
    %p170 = por %p168, %p169
    %p171 = scmp.ne.s32.totalorder %s162, %s163
    %p172 = scmp.eq.s32.totalorder %s21, 0
    %p173 = por %p171, %p172
    %p174 = scmp.ne.s32.totalorder %s162, %s163
    %p175 = scmp.eq.s32.totalorder %s22, 1
    %p176 = por %p174, %p175
    %p178 = scmp.ne.s32.totalorder %s163, %s177
    %p179 = scmp.eq.s32.totalorder %s22, 0
    %p180 = por %p178, %p179
    %s182 = sadd.s32 %s181, 1
    %p185 = scmp.eq.s32.totalorder %s16, 1
    %p186 = scmp.ne.s32.totalorder %s181, %s183
    %p187 = scmp.eq.s32.totalorder %s16, 0
    %p188 = por %p186, %p187
    %p189 = scmp.ne.s32.totalorder %s181, %s183
    %p190 = scmp.eq.s32.totalorder %s21, 1
    %p191 = por %p189, %p190
    %p192 = scmp.ne.s32.totalorder %s183, %s184
    %p193 = scmp.eq.s32.totalorder %s21, 0
    %p194 = por %p192, %p193
    %p195 = scmp.ne.s32.totalorder %s183, %s184
    %p196 = scmp.eq.s32.totalorder %s22, 1
    %p197 = por %p195, %p196
    %p199 = scmp.ne.s32.totalorder %s184, %s198
    %p200 = scmp.eq.s32.totalorder %s22, 0
    %p201 = por %p199, %p200
    %s203 = sadd.s32 %s202, 1
    %p206 = scmp.eq.s32.totalorder %s16, 1
    %p207 = scmp.ne.s32.totalorder %s202, %s204
    %p208 = scmp.eq.s32.totalorder %s16, 0
    %p209 = por %p207, %p208
    %p210 = scmp.ne.s32.totalorder %s202, %s204
    %p211 = scmp.eq.s32.totalorder %s21, 1
    %p212 = por %p210, %p211
    %p213 = scmp.ne.s32.totalorder %s204, %s205
    %p214 = scmp.eq.s32.totalorder %s21, 0
    %p215 = por %p213, %p214
    %p216 = scmp.ne.s32.totalorder %s204, %s205
    %p217 = scmp.eq.s32.totalorder %s22, 1
    %p218 = por %p216, %p217
    %p220 = scmp.ne.s32.totalorder %s205, %s219
    %p221 = scmp.eq.s32.totalorder %s22, 0
    %p222 = por %p220, %p221
    %s223 = ssub.s32 %s16, %s23
    %p224 = scmp.eq.s32.totalorder %s223, 0
    %s226 = sadd.s32 %s225, 1
    %s227 = scalar_select %p224, %s225, %s226
    %p230 = pneg %p224
    %p231 = scmp.eq.s32.totalorder %s16, 1
    %p232 = por %p230, %p231
    %p233 = scmp.ne.s32.totalorder %s225, %s228
    %p234 = scmp.eq.s32.totalorder %s16, 0
    %p235 = por %p233, %p234
    %p236 = scmp.ne.s32.totalorder %s225, %s228
    %p237 = scmp.eq.s32.totalorder %s21, 1
    %p238 = por %p236, %p237
    %p239 = scmp.ne.s32.totalorder %s228, %s229
    %p240 = scmp.eq.s32.totalorder %s21, 0
    %p241 = por %p239, %p240
    %p242 = scmp.ne.s32.totalorder %s228, %s229
    %p243 = scmp.eq.s32.totalorder %s22, 1
    %p244 = por %p242, %p243
    %p246 = scmp.ne.s32.totalorder %s229, %s245
    %p247 = scmp.eq.s32.totalorder %s22, 0
    %p248 = por %p246, %p247
    %p249 = scmp.le.s32.totalorder 1, %s16
    %p250 = scmp.lt.s32.totalorder %s16, 3
    %p251 = pnand %p249, %p250
    %p252 = pneg %p251
    // Predicated region
    $region9: #{reward_model_forward.1} parent=5 // pred_check
      _
    $region10: #{reward_model_forward.1} parent=5 // pred_check_branch
      %254 = sbr.rel (%p251) target = $region12
    $region11: #{reward_model_forward.1} parent=5 // pred_region
      %s255 = ssub.s32 %s16, 1
      // Predicated region
      $region13: #{reward_model_forward.1} parent=11 // pred_check
        %p256 = pneg %p89
      $region14: #{reward_model_forward.1} parent=11 // pred_check_branch
        %258 = sbr.rel (%p256) target = $region16
      $region15: #{reward_model_forward.1} parent=11 // pred_region
        _
      $region16: #{reward_model_forward.1} parent=11 // pred_fallthru
        _
      // Predicated region
      $region17: #{reward_model_forward.1} parent=11 // pred_check
        %p259 = pneg %p110
      $region18: #{reward_model_forward.1} parent=11 // pred_check_branch
        %261 = sbr.rel (%p259) target = $region20
      $region19: #{reward_model_forward.1} parent=11 // pred_region
        _
      $region20: #{reward_model_forward.1} parent=11 // pred_fallthru
        _
      // Predicated region
      $region21: #{reward_model_forward.1} parent=11 // pred_check
        %p262 = pneg %p131
      $region22: #{reward_model_forward.1} parent=11 // pred_check_branch
        %264 = sbr.rel (%p262) target = $region24
      $region23: #{reward_model_forward.1} parent=11 // pred_region
        _
      $region24: #{reward_model_forward.1} parent=11 // pred_fallthru
        _
      // Predicated region
      $region25: #{reward_model_forward.1} parent=11 // pred_check
        %p265 = pneg %p152
      $region26: #{reward_model_forward.1} parent=11 // pred_check_branch
        %267 = sbr.rel (%p265) target = $region28
      $region27: #{reward_model_forward.1} parent=11 // pred_region
        _
      $region28: #{reward_model_forward.1} parent=11 // pred_fallthru
        _
      // Predicated region
      $region29: #{reward_model_forward.1} parent=11 // pred_check
        %p268 = pneg %p173
      $region30: #{reward_model_forward.1} parent=11 // pred_check_branch
        %270 = sbr.rel (%p268) target = $region32
      $region31: #{reward_model_forward.1} parent=11 // pred_region
        _
      $region32: #{reward_model_forward.1} parent=11 // pred_fallthru
        _
      // Predicated region
      $region33: #{reward_model_forward.1} parent=11 // pred_check
        %p271 = pneg %p194
      $region34: #{reward_model_forward.1} parent=11 // pred_check_branch
        %273 = sbr.rel (%p271) target = $region36
      $region35: #{reward_model_forward.1} parent=11 // pred_region
        _
      $region36: #{reward_model_forward.1} parent=11 // pred_fallthru
        _
      // Predicated region
      $region37: #{reward_model_forward.1} parent=11 // pred_check
        %p274 = pneg %p215
      $region38: #{reward_model_forward.1} parent=11 // pred_check_branch
        %276 = sbr.rel (%p274) target = $region40
      $region39: #{reward_model_forward.1} parent=11 // pred_region
        _
      $region40: #{reward_model_forward.1} parent=11 // pred_fallthru
        _
    $region12: #{reward_model_forward.1} parent=5 // pred_fallthru
      _
    %p277 = scmp.lt.s32.totalorder %s16, 2
    // Predicated region
    $region41: #{reward_model_forward.1} parent=5 // pred_check
      %p278 = pneg %p277
    $region42: #{reward_model_forward.1} parent=5 // pred_check_branch
      %280 = sbr.rel (%p278) target = $region44
    $region43: #{reward_model_forward.1} parent=5 // pred_region
      // Predicated region
      $region45: #{reward_model_forward.1} parent=43 // pred_check
        %p281 = pneg %p36
      $region46: #{reward_model_forward.1} parent=43 // pred_check_branch
        %283 = sbr.rel (%p281) target = $region48
      $region47: #{reward_model_forward.1} parent=43 // pred_region
        %s284 = smul.u32 2, %s16
        %p285 = scmp.lt.s32.totalorder %s284, 3
        %s286 = scalar_select %p285, %s284, 3
        %s287 = smul.addr %s286, 8
        %s288 = scalar_lea.vmem %s0, %s287
        %s289 = smul.u32 2, %s16
      $region48: #{reward_model_forward.1} parent=43 // pred_fallthru
        _
      // Predicated region
      $region49: #{reward_model_forward.1} parent=43 // pred_check
        %p290 = pneg %p62
      $region50: #{reward_model_forward.1} parent=43 // pred_check_branch
        %292 = sbr.rel (%p290) target = $region52
      $region51: #{reward_model_forward.1} parent=43 // pred_region
        %s293 = smul.u32 2, %s16
        %p294 = scmp.lt.s32.totalorder %s293, 3
        %s295 = scalar_select %p294, %s293, 3
        %s296 = smul.addr %s295, 8
        %s297 = scalar_lea.vmem %s1, %s296
        %s298 = smul.u32 2, %s16
      $region52: #{reward_model_forward.1} parent=43 // pred_fallthru
        _
    $region44: #{reward_model_forward.1} parent=5 // pred_fallthru
      _
    %p299 = scmp.le.s32.totalorder 1, %s16
    %p300 = scmp.lt.s32.totalorder %s16, 3
    %p301 = pnand %p299, %p300
    %p302 = pneg %p301
    // Predicated region
    $region53: #{reward_model_forward.1} parent=5 // pred_check
      _
    $region54: #{reward_model_forward.1} parent=5 // pred_check_branch
      %304 = sbr.rel (%p301) target = $region56
    $region55: #{reward_model_forward.1} parent=5 // pred_region
      %s305 = ssub.s32 %s16, 1
      %s306 = smul.u32 2, %s21
      %p307 = scmp.lt.s32.totalorder %s306, 3
      %s308 = scalar_select %p307, %s306, 3
      %s309 = smul.addr %s308, 8
      %s310 = scalar_lea.vmem %s0, %s309
      %p311 = pneg %p42
      %p312 = pneg %p39
      %s313 = smul.u32 2, %s21
      %p314 = scmp.lt.s32.totalorder %s313, 3
      %s315 = scalar_select %p314, %s313, 3
      %s316 = smul.addr %s315, 8
      %s317 = scalar_lea.vmem %s1, %s316
      %p318 = pneg %p68
      %p319 = pneg %p65
      %p320 = pneg %p89
      %p321 = pneg %p86
      %p322 = pneg %p110
      %p323 = pneg %p107
      %p324 = pneg %p131
      %p325 = pneg %p128
      %p326 = pneg %p152
      %p327 = pneg %p149
      %p328 = pneg %p173
      %p329 = pneg %p170
      %p330 = pneg %p194
      %p331 = pneg %p191
      %p332 = pneg %p215
      %p333 = pneg %p212
      %p334 = pneg %p241
      %p335 = pneg %p238
      %s336 = smul.u32 2, %s21
      %p337 = scmp.lt.s32.totalorder %s336, 3
      %s338 = scalar_select %p337, %s336, 3
      %s339 = smul.addr %s338, 8
      %s340 = scalar_lea.vmem %s9, %s339
      %s341 = smul.u32 2, %s21
      %p342 = scmp.lt.s32.totalorder %s341, 3
      %s343 = scalar_select %p342, %s341, 3
      %s344 = smul.addr %s343, 8
      %s345 = scalar_lea.vmem %s0, %s344
      %s346 = smul.u32 2, %s21
      %s347 = smul.u32 2, %s21
      %p348 = scmp.lt.s32.totalorder %s347, 3
      %s349 = scalar_select %p348, %s347, 3
      %s350 = smul.addr %s349, 8
      %s351 = scalar_lea.vmem %s1, %s350
      %s352 = smul.u32 2, %s21
      %s353 = smul.u32 2, %s21
      %p354 = scmp.lt.s32.totalorder %s353, 3
      %s355 = scalar_select %p354, %s353, 3
      %s356 = smul.addr %s355, 8
      %s357 = scalar_lea.vmem %s9, %s356
      %s358 = smul.u32 2, %s21
      %v360 = vld [vmem:[%s345] sm:$0xff]
      %v361 = vld [vmem:[%s345 + $0x8] sm:$0xff]
      %v362 = vpack.c.bf16 %v361, %v360
      %v363 = vld [vmem:[%s2] sm:$0xff]
      %v364 = vld [vmem:[%s2 + $0x8] sm:$0xff]
      %v365 = vld [vmem:[%s2 + $0x10] sm:$0xff]
      %v366 = vld [vmem:[%s2 + $0x18] sm:$0xff]
      %v367 = vld [vmem:[%s2 + $0x20] sm:$0xff]
      %v368 = vld [vmem:[%s2 + $0x28] sm:$0xff]
      %v369 = vld [vmem:[%s2 + $0x30] sm:$0xff]
      %v370 = vld [vmem:[%s2 + $0x38] sm:$0xff]
      %v371 = vld [vmem:[%s2 + $0x40] sm:$0xff]
      %v372 = vld [vmem:[%s2 + $0x48] sm:$0xff]
      %v373 = vld [vmem:[%s2 + $0x50] sm:$0xff]
      %v374 = vld [vmem:[%s2 + $0x58] sm:$0xff]
      %v375 = vld [vmem:[%s2 + $0x60] sm:$0xff]
      %v376 = vld [vmem:[%s2 + $0x68] sm:$0xff]
      %v377 = vld [vmem:[%s2 + $0x70] sm:$0xff]
      %v378 = vld [vmem:[%s2 + $0x78] sm:$0xff]
      %v379 = vld [vmem:[%s2 + $0x80] sm:$0xff]
      %v380 = vld [vmem:[%s2 + $0x88] sm:$0xff]
      %v381 = vld [vmem:[%s2 + $0x90] sm:$0xff]
      %v382 = vld [vmem:[%s2 + $0x98] sm:$0xff]
      %v383 = vld [vmem:[%s2 + $0xa0] sm:$0xff]
      %v384 = vld [vmem:[%s2 + $0xa8] sm:$0xff]
      %v385 = vld [vmem:[%s2 + $0xb0] sm:$0xff]
      %v386 = vld [vmem:[%s2 + $0xb8] sm:$0xff]
      %v387 = vld [vmem:[%s2 + $0xc0] sm:$0xff]
      %v388 = vld [vmem:[%s2 + $0xc8] sm:$0xff]
      %v389 = vld [vmem:[%s2 + $0xd0] sm:$0xff]
      %v390 = vld [vmem:[%s2 + $0xd8] sm:$0xff]
      %v391 = vld [vmem:[%s2 + $0xe0] sm:$0xff]
      %v392 = vld [vmem:[%s2 + $0xe8] sm:$0xff]
      %v393 = vld [vmem:[%s2 + $0xf0] sm:$0xff]
      %v394 = vld [vmem:[%s2 + $0xf8] sm:$0xff]
      %v395 = vld [vmem:[%s351] sm:$0xff]
      %v396 = vld [vmem:[%s351 + $0x8] sm:$0xff]
      %v397 = vpack.c.bf16 %v396, %v395
      %v398 = vld [vmem:[%s3] sm:$0xff]
      %v399 = vld [vmem:[%s3 + $0x8] sm:$0xff]
      %v400 = vld [vmem:[%s3 + $0x10] sm:$0xff]
      %v401 = vld [vmem:[%s3 + $0x18] sm:$0xff]
      %v402 = vld [vmem:[%s3 + $0x20] sm:$0xff]
      %v403 = vld [vmem:[%s3 + $0x28] sm:$0xff]
      %v404 = vld [vmem:[%s3 + $0x30] sm:$0xff]
      %v405 = vld [vmem:[%s3 + $0x38] sm:$0xff]
      %v406 = vld [vmem:[%s3 + $0x40] sm:$0xff]
      %v407 = vld [vmem:[%s3 + $0x48] sm:$0xff]
      %v408 = vld [vmem:[%s3 + $0x50] sm:$0xff]
      %v409 = vld [vmem:[%s3 + $0x58] sm:$0xff]
      %v410 = vld [vmem:[%s3 + $0x60] sm:$0xff]
      %v411 = vld [vmem:[%s3 + $0x68] sm:$0xff]
      %v412 = vld [vmem:[%s3 + $0x70] sm:$0xff]
      %v413 = vld [vmem:[%s3 + $0x78] sm:$0xff]
      %v430 = vunpack.c.l.b16 %v398
      %v431 = vunpack.c.h.b16 %v398
      %v432 = vunpack.c.l.b16 %v399
      %v433 = vunpack.c.h.b16 %v399
      %v434 = vunpack.c.l.b16 %v400
      %v435 = vunpack.c.h.b16 %v400
      %v436 = vunpack.c.l.b16 %v401
      %v437 = vunpack.c.h.b16 %v401
      %v438 = vunpack.c.l.b16 %v402
      %v439 = vunpack.c.h.b16 %v402
      %v440 = vunpack.c.l.b16 %v403
      %v441 = vunpack.c.h.b16 %v403
      %v442 = vunpack.c.l.b16 %v404
      %v443 = vunpack.c.h.b16 %v404
      %v444 = vunpack.c.l.b16 %v405
      %v445 = vunpack.c.h.b16 %v405
      %v446 = vunpack.c.l.b16 %v406
      %v447 = vunpack.c.h.b16 %v406
      %v448 = vunpack.c.l.b16 %v407
      %v449 = vunpack.c.h.b16 %v407
      %v450 = vunpack.c.l.b16 %v408
      %v451 = vunpack.c.h.b16 %v408
      %v452 = vunpack.c.l.b16 %v409
      %v453 = vunpack.c.h.b16 %v409
      %v454 = vunpack.c.l.b16 %v410
      %v455 = vunpack.c.h.b16 %v410
      %v456 = vunpack.c.l.b16 %v411
      %v457 = vunpack.c.h.b16 %v411
      %v458 = vunpack.c.l.b16 %v412
      %v459 = vunpack.c.h.b16 %v412
      %v460 = vunpack.c.l.b16 %v413
      %v461 = vunpack.c.h.b16 %v413
      %v462 = vpack.c.b16 %v434, %v430
      %v463 = vpack.c.b16 %v435, %v431
      %v464 = vpack.c.b16 %v436, %v432
      %v465 = vpack.c.b16 %v437, %v433
      %v466 = vpack.c.b16 %v442, %v438
      %v467 = vpack.c.b16 %v443, %v439
      %v468 = vpack.c.b16 %v444, %v440
      %v469 = vpack.c.b16 %v445, %v441
      %v470 = vpack.c.b16 %v450, %v446
      %v471 = vpack.c.b16 %v451, %v447
      %v472 = vpack.c.b16 %v452, %v448
      %v473 = vpack.c.b16 %v453, %v449
      %v474 = vpack.c.b16 %v458, %v454
      %v475 = vpack.c.b16 %v459, %v455
      %v476 = vpack.c.b16 %v460, %v456
      %v477 = vpack.c.b16 %v461, %v457
      %vm494 = vcmask 523264
      %v496 = vsel %vm494, %v397, 0
      %498 = vmatprep.subr.bf16.mxu0 %v463
      %499 = vmatpush1.bf16.msra.mxu0 %v462
      %500 = vmatprep.subr.bf16.mxu0 %v467
      %501 = vmatpush1.bf16.msra.mxu0 %v466
      %502 = vmatprep.subr.bf16.mxu0 %v471
      %503 = vmatpush1.bf16.msra.mxu0 %v470
      %504 = vmatprep.subr.bf16.mxu0 %v475
      %505 = vmatpush1.bf16.msra.mxu0 %v474
      %506 = vmatprep.subr.bf16.mxu0 0
      %507 = vmatpush1.bf16.msra.mxu0 0
      %508 = vmatprep.subr.bf16.mxu0 0
      %509 = vmatpush1.bf16.msra.mxu0 0
      %510 = vmatprep.subr.bf16.mxu0 0
      %511 = vmatpush1.bf16.msra.mxu0 0
      %512 = vmatprep.subr.bf16.mxu0 0
      %513 = vmatpush1.bf16.msra.mxu0 0
      %514 = vmatprep.subr.bf16.mxu0 0
      %515 = vmatpush1.bf16.msra.mxu0 0
      %516 = vmatprep.subr.bf16.mxu0 0
      %517 = vmatpush1.bf16.msra.mxu0 0
      %518 = vmatprep.subr.bf16.mxu0 0
      %519 = vmatpush1.bf16.msra.mxu0 0
      %520 = vmatprep.subr.bf16.mxu0 0
      %521 = vmatpush1.bf16.msra.mxu0 0
      %522 = vmatprep.subr.bf16.mxu0 0
      %523 = vmatpush1.bf16.msra.mxu0 0
      %524 = vmatprep.subr.bf16.mxu0 0
      %525 = vmatpush1.bf16.msra.mxu0 0
      %526 = vmatprep.subr.bf16.mxu0 0
      %527 = vmatpush1.bf16.msra.mxu0 0
      %528 = vmatprep.subr.bf16.mxu0 0
      %529 = vmatpush1.bf16.msra.mxu0 0
      %530 = vmatprep.mubr.bf16.mxu0 0
      %531 = vmatmul.mubr.bf16.gmra.mrb[0].mxu0 %v496
      %v532 = vpop.f32.mrb[0].mxu0
      %v533 = vadd.f32 0.0, %v532
      %v534 = vpop.f32.mrb[0].mxu0
      %v535 = vadd.f32 0.0, %v534
      %v536 = vpop.f32.mrb[0].mxu0
      %v537 = vadd.f32 0.0, %v536
      %v538 = vpop.f32.mrb[0].mxu0
      %v539 = vadd.f32 0.0, %v538
      %540 = vdwg.mxu0
      %541 = vmatprep.subr.bf16.mxu0 %v465
      %542 = vmatpush1.bf16.msra.mxu0 %v464
      %543 = vmatprep.subr.bf16.mxu0 %v469
      %544 = vmatpush1.bf16.msra.mxu0 %v468
      %545 = vmatprep.subr.bf16.mxu0 %v473
      %546 = vmatpush1.bf16.msra.mxu0 %v472
      %547 = vmatprep.subr.bf16.mxu0 %v477
      %548 = vmatpush1.bf16.msra.mxu0 %v476
      %549 = vmatprep.subr.bf16.mxu0 0
      %550 = vmatpush1.bf16.msra.mxu0 0
      %551 = vmatprep.subr.bf16.mxu0 0
      %552 = vmatpush1.bf16.msra.mxu0 0
      %553 = vmatprep.subr.bf16.mxu0 0
      %554 = vmatpush1.bf16.msra.mxu0 0
      %555 = vmatprep.subr.bf16.mxu0 0
      %556 = vmatpush1.bf16.msra.mxu0 0
      %557 = vmatprep.subr.bf16.mxu0 0
      %558 = vmatpush1.bf16.msra.mxu0 0
      %559 = vmatprep.subr.bf16.mxu0 0
      %560 = vmatpush1.bf16.msra.mxu0 0
      %561 = vmatprep.subr.bf16.mxu0 0
      %562 = vmatpush1.bf16.msra.mxu0 0
      %563 = vmatprep.subr.bf16.mxu0 0
      %564 = vmatpush1.bf16.msra.mxu0 0
      %565 = vmatprep.subr.bf16.mxu0 0
      %566 = vmatpush1.bf16.msra.mxu0 0
      %567 = vmatprep.subr.bf16.mxu0 0
      %568 = vmatpush1.bf16.msra.mxu0 0
      %569 = vmatprep.subr.bf16.mxu0 0
      %570 = vmatpush1.bf16.msra.mxu0 0
      %571 = vmatprep.subr.bf16.mxu0 0
      %572 = vmatpush1.bf16.msra.mxu0 0
      %573 = vmatprep.mubr.bf16.mxu0 0
      %574 = vmatmul.mubr.bf16.gmra.mrb[0].mxu0 %v496
      %v575 = vpop.f32.mrb[0].mxu0
      %v576 = vadd.f32 0.0, %v575
      %v577 = vpop.f32.mrb[0].mxu0
      %v578 = vadd.f32 0.0, %v577
      %v579 = vpop.f32.mrb[0].mxu0
      %v580 = vadd.f32 0.0, %v579
      %v581 = vpop.f32.mrb[0].mxu0
      %v582 = vadd.f32 0.0, %v581
      %583 = vdwg.mxu0
      %v616 = vunpack.c.l.b16 %v363
      %v617 = vunpack.c.h.b16 %v363
      %v618 = vunpack.c.l.b16 %v364
      %v619 = vunpack.c.h.b16 %v364
      %v620 = vunpack.c.l.b16 %v365
      %v621 = vunpack.c.h.b16 %v365
      %v622 = vunpack.c.l.b16 %v366
      %v623 = vunpack.c.h.b16 %v366
      %v624 = vunpack.c.l.b16 %v367
      %v625 = vunpack.c.h.b16 %v367
      %v626 = vunpack.c.l.b16 %v368
      %v627 = vunpack.c.h.b16 %v368
      %v628 = vunpack.c.l.b16 %v369
      %v629 = vunpack.c.h.b16 %v369
      %v630 = vunpack.c.l.b16 %v370
      %v631 = vunpack.c.h.b16 %v370
      %v632 = vunpack.c.l.b16 %v371
      %v633 = vunpack.c.h.b16 %v371
      %v634 = vunpack.c.l.b16 %v372
      %v635 = vunpack.c.h.b16 %v372
      %v636 = vunpack.c.l.b16 %v373
      %v637 = vunpack.c.h.b16 %v373
      %v638 = vunpack.c.l.b16 %v374
      %v639 = vunpack.c.h.b16 %v374
      %v640 = vunpack.c.l.b16 %v375
      %v641 = vunpack.c.h.b16 %v375
      %v642 = vunpack.c.l.b16 %v376
      %v643 = vunpack.c.h.b16 %v376
      %v644 = vunpack.c.l.b16 %v377
      %v645 = vunpack.c.h.b16 %v377
      %v646 = vunpack.c.l.b16 %v378
      %v647 = vunpack.c.h.b16 %v378
      %v648 = vunpack.c.l.b16 %v379
      %v649 = vunpack.c.h.b16 %v379
      %v650 = vunpack.c.l.b16 %v380
      %v651 = vunpack.c.h.b16 %v380
      %v652 = vunpack.c.l.b16 %v381
      %v653 = vunpack.c.h.b16 %v381
      %v654 = vunpack.c.l.b16 %v382
      %v655 = vunpack.c.h.b16 %v382
      %v656 = vunpack.c.l.b16 %v383
      %v657 = vunpack.c.h.b16 %v383
      %v658 = vunpack.c.l.b16 %v384
      %v659 = vunpack.c.h.b16 %v384
      %v660 = vunpack.c.l.b16 %v385
      %v661 = vunpack.c.h.b16 %v385
      %v662 = vunpack.c.l.b16 %v386
      %v663 = vunpack.c.h.b16 %v386
      %v664 = vunpack.c.l.b16 %v387
      %v665 = vunpack.c.h.b16 %v387
      %v666 = vunpack.c.l.b16 %v388
      %v667 = vunpack.c.h.b16 %v388
      %v668 = vunpack.c.l.b16 %v389
      %v669 = vunpack.c.h.b16 %v389
      %v670 = vunpack.c.l.b16 %v390
      %v671 = vunpack.c.h.b16 %v390
      %v672 = vunpack.c.l.b16 %v391
      %v673 = vunpack.c.h.b16 %v391
      %v674 = vunpack.c.l.b16 %v392
      %v675 = vunpack.c.h.b16 %v392
      %v676 = vunpack.c.l.b16 %v393
      %v677 = vunpack.c.h.b16 %v393
      %v678 = vunpack.c.l.b16 %v394
      %v679 = vunpack.c.h.b16 %v394
      %v680 = vpack.c.b16 %v620, %v616
      %v681 = vpack.c.b16 %v621, %v617
      %v682 = vpack.c.b16 %v622, %v618
      %v683 = vpack.c.b16 %v623, %v619
      %v684 = vpack.c.b16 %v628, %v624
      %v685 = vpack.c.b16 %v629, %v625
      %v686 = vpack.c.b16 %v630, %v626
      %v687 = vpack.c.b16 %v631, %v627
      %v688 = vpack.c.b16 %v636, %v632
      %v689 = vpack.c.b16 %v637, %v633
      %v690 = vpack.c.b16 %v638, %v634
      %v691 = vpack.c.b16 %v639, %v635
      %v692 = vpack.c.b16 %v644, %v640
      %v693 = vpack.c.b16 %v645, %v641
      %v694 = vpack.c.b16 %v646, %v642
      %v695 = vpack.c.b16 %v647, %v643
      %v696 = vpack.c.b16 %v652, %v648
      %v697 = vpack.c.b16 %v653, %v649
      %v698 = vpack.c.b16 %v654, %v650
      %v699 = vpack.c.b16 %v655, %v651
      %v700 = vpack.c.b16 %v660, %v656
      %v701 = vpack.c.b16 %v661, %v657
      %v702 = vpack.c.b16 %v662, %v658
      %v703 = vpack.c.b16 %v663, %v659
      %v704 = vpack.c.b16 %v668, %v664
      %v705 = vpack.c.b16 %v669, %v665
      %v706 = vpack.c.b16 %v670, %v666
      %v707 = vpack.c.b16 %v671, %v667
      %v708 = vpack.c.b16 %v676, %v672
      %v709 = vpack.c.b16 %v677, %v673
      %v710 = vpack.c.b16 %v678, %v674
      %v711 = vpack.c.b16 %v679, %v675
      %744 = vmatprep.subr.bf16.mxu0 %v681
      %745 = vmatpush1.bf16.msra.mxu0 %v680
      %746 = vmatprep.subr.bf16.mxu0 %v685
      %747 = vmatpush1.bf16.msra.mxu0 %v684
      %748 = vmatprep.subr.bf16.mxu0 %v689
      %749 = vmatpush1.bf16.msra.mxu0 %v688
      %750 = vmatprep.subr.bf16.mxu0 %v693
      %751 = vmatpush1.bf16.msra.mxu0 %v692
      %752 = vmatprep.subr.bf16.mxu0 %v697
      %753 = vmatpush1.bf16.msra.mxu0 %v696
      %754 = vmatprep.subr.bf16.mxu0 %v701
      %755 = vmatpush1.bf16.msra.mxu0 %v700
      %756 = vmatprep.subr.bf16.mxu0 %v705
      %757 = vmatpush1.bf16.msra.mxu0 %v704
      %758 = vmatprep.subr.bf16.mxu0 %v709
      %759 = vmatpush1.bf16.msra.mxu0 %v708
      %760 = vmatprep.subr.bf16.mxu0 0
      %761 = vmatpush1.bf16.msra.mxu0 0
      %762 = vmatprep.subr.bf16.mxu0 0
      %763 = vmatpush1.bf16.msra.mxu0 0
      %764 = vmatprep.subr.bf16.mxu0 0
      %765 = vmatpush1.bf16.msra.mxu0 0
      %766 = vmatprep.subr.bf16.mxu0 0
      %767 = vmatpush1.bf16.msra.mxu0 0
      %768 = vmatprep.subr.bf16.mxu0 0
      %769 = vmatpush1.bf16.msra.mxu0 0
      %770 = vmatprep.subr.bf16.mxu0 0
      %771 = vmatpush1.bf16.msra.mxu0 0
      %772 = vmatprep.subr.bf16.mxu0 0
      %773 = vmatpush1.bf16.msra.mxu0 0
      %774 = vmatprep.subr.bf16.mxu0 0
      %775 = vmatpush1.bf16.msra.mxu0 0
      %776 = vmatprep.mubr.bf16.mxu0 0
      %777 = vmatmul.mubr.bf16.gmra.mrb[0].mxu0 %v362
      %v778 = vpop.f32.mrb[0].mxu0
      %v779 = vadd.f32 %v533, %v778
      %v780 = vpop.f32.mrb[0].mxu0
      %v781 = vadd.f32 %v535, %v780
      %v782 = vpop.f32.mrb[0].mxu0
      %v783 = vadd.f32 %v537, %v782
      %v784 = vpop.f32.mrb[0].mxu0
      %v785 = vadd.f32 %v539, %v784
      %786 = vdwg.mxu0
      %787 = vmatprep.subr.bf16.mxu0 %v683
      %788 = vmatpush1.bf16.msra.mxu0 %v682
      %789 = vmatprep.subr.bf16.mxu0 %v687
      %790 = vmatpush1.bf16.msra.mxu0 %v686
      %791 = vmatprep.subr.bf16.mxu0 %v691
      %792 = vmatpush1.bf16.msra.mxu0 %v690
      %793 = vmatprep.subr.bf16.mxu0 %v695
      %794 = vmatpush1.bf16.msra.mxu0 %v694
      %795 = vmatprep.subr.bf16.mxu0 %v699
      %796 = vmatpush1.bf16.msra.mxu0 %v698
      %797 = vmatprep.subr.bf16.mxu0 %v703
      %798 = vmatpush1.bf16.msra.mxu0 %v702
      %799 = vmatprep.subr.bf16.mxu0 %v707
      %800 = vmatpush1.bf16.msra.mxu0 %v706
      %801 = vmatprep.subr.bf16.mxu0 %v711
      %802 = vmatpush1.bf16.msra.mxu0 %v710
      %803 = vmatprep.subr.bf16.mxu0 0
      %804 = vmatpush1.bf16.msra.mxu0 0
      %805 = vmatprep.subr.bf16.mxu0 0
      %806 = vmatpush1.bf16.msra.mxu0 0
      %807 = vmatprep.subr.bf16.mxu0 0
      %808 = vmatpush1.bf16.msra.mxu0 0
      %809 = vmatprep.subr.bf16.mxu0 0
      %810 = vmatpush1.bf16.msra.mxu0 0
      %811 = vmatprep.subr.bf16.mxu0 0
      %812 = vmatpush1.bf16.msra.mxu0 0
      %813 = vmatprep.subr.bf16.mxu0 0
      %814 = vmatpush1.bf16.msra.mxu0 0
      %815 = vmatprep.subr.bf16.mxu0 0
      %816 = vmatpush1.bf16.msra.mxu0 0
      %817 = vmatprep.subr.bf16.mxu0 0
      %818 = vmatpush1.bf16.msra.mxu0 0
      %819 = vmatprep.mubr.bf16.mxu0 0
      %820 = vmatmul.mubr.bf16.gmra.mrb[0].mxu0 %v362
      %v821 = vpop.f32.mrb[0].mxu0
      %v822 = vadd.f32 %v576, %v821
      %v823 = vpop.f32.mrb[0].mxu0
      %v824 = vadd.f32 %v578, %v823
      %v825 = vpop.f32.mrb[0].mxu0
      %v826 = vadd.f32 %v580, %v825
      %v827 = vpop.f32.mrb[0].mxu0
      %v828 = vadd.f32 %v582, %v827
      %829 = vdwg.mxu0
      %v830 = vld [vmem:[%s4] sm:$0xf]
      %v832 = vlaneseq
      %v833 = vshrl.u32 %v832, 7
      %v834 = vsub.s32 0, %v833
      %v835 = vrot.slane %v830, %v834
      %v836 = vlaneseq
      %v837 = vshrl.u32 %v836, 7
      %v838 = vsub.s32 1, %v837
      %v839 = vrot.slane %v830, %v838
      %v840 = vlaneseq
      %v841 = vshrl.u32 %v840, 7
      %v842 = vsub.s32 2, %v841
      %v843 = vrot.slane %v830, %v842
      %v844 = vlaneseq
      %v845 = vshrl.u32 %v844, 7
      %v846 = vsub.s32 3, %v845
      %v847 = vrot.slane %v830, %v846
      %v852 = vadd.f32 %v779, %v835
      %v853 = vadd.f32 %v781, %v839
      %v854 = vadd.f32 %v822, %v843
      %v855 = vadd.f32 %v824, %v847
      %v856 = vadd.f32 %v783, %v835
      %v857 = vadd.f32 %v785, %v839
      %v858 = vadd.f32 %v826, %v843
      %v859 = vadd.f32 %v828, %v847
      %v860 = vmax.f32 %v852, 0.0
      %v861 = vmax.f32 %v853, 0.0
      %v862 = vmax.f32 %v854, 0.0
      %v863 = vmax.f32 %v855, 0.0
      %v864 = vmax.f32 %v856, 0.0
      %v865 = vmax.f32 %v857, 0.0
      %v866 = vmax.f32 %v858, 0.0
      %v867 = vmax.f32 %v859, 0.0
      %v868 = vpack.c.bf16 %v864, %v860
      %v869 = vpack.c.bf16 %v865, %v861
      %v870 = vpack.c.bf16 %v866, %v862
      %v871 = vpack.c.bf16 %v867, %v863
      %v872 = vld [vmem:[%s5] sm:$0xf]
      %v873 = vld [vmem:[%s5 + $0x4] sm:$0xf]
      %v874 = vld [vmem:[%s5 + $0x8] sm:$0xf]
      %v875 = vld [vmem:[%s5 + $0xc] sm:$0xf]
      %v876 = vld [vmem:[%s5 + $0x10] sm:$0xf]
      %v877 = vld [vmem:[%s5 + $0x14] sm:$0xf]
      %v878 = vld [vmem:[%s5 + $0x18] sm:$0xf]
      %v879 = vld [vmem:[%s5 + $0x1c] sm:$0xf]
      %v880 = vld [vmem:[%s5 + $0x20] sm:$0xf]
      %v881 = vld [vmem:[%s5 + $0x24] sm:$0xf]
      %v882 = vld [vmem:[%s5 + $0x28] sm:$0xf]
      %v883 = vld [vmem:[%s5 + $0x2c] sm:$0xf]
      %v884 = vld [vmem:[%s5 + $0x30] sm:$0xf]
      %v885 = vld [vmem:[%s5 + $0x34] sm:$0xf]
      %v886 = vld [vmem:[%s5 + $0x38] sm:$0xf]
      %v887 = vld [vmem:[%s5 + $0x3c] sm:$0xf]
      %v888 = vld [vmem:[%s5 + $0x40] sm:$0xf]
      %v889 = vld [vmem:[%s5 + $0x44] sm:$0xf]
      %v890 = vld [vmem:[%s5 + $0x48] sm:$0xf]
      %v891 = vld [vmem:[%s5 + $0x4c] sm:$0xf]
      %v892 = vld [vmem:[%s5 + $0x50] sm:$0xf]
      %v893 = vld [vmem:[%s5 + $0x54] sm:$0xf]
      %v894 = vld [vmem:[%s5 + $0x58] sm:$0xf]
      %v895 = vld [vmem:[%s5 + $0x5c] sm:$0xf]
      %v896 = vld [vmem:[%s5 + $0x60] sm:$0xf]
      %v897 = vld [vmem:[%s5 + $0x64] sm:$0xf]
      %v898 = vld [vmem:[%s5 + $0x68] sm:$0xf]
      %v899 = vld [vmem:[%s5 + $0x6c] sm:$0xf]
      %v900 = vld [vmem:[%s5 + $0x70] sm:$0xf]
      %v901 = vld [vmem:[%s5 + $0x74] sm:$0xf]
      %v902 = vld [vmem:[%s5 + $0x78] sm:$0xf]
      %v903 = vld [vmem:[%s5 + $0x7c] sm:$0xf]
      %v904 = vld [vmem:[%s5 + $0x80] sm:$0xf]
      %v905 = vld [vmem:[%s5 + $0x84] sm:$0xf]
      %v906 = vld [vmem:[%s5 + $0x88] sm:$0xf]
      %v907 = vld [vmem:[%s5 + $0x8c] sm:$0xf]
      %v908 = vld [vmem:[%s5 + $0x90] sm:$0xf]
      %v909 = vld [vmem:[%s5 + $0x94] sm:$0xf]
      %v910 = vld [vmem:[%s5 + $0x98] sm:$0xf]
      %v911 = vld [vmem:[%s5 + $0x9c] sm:$0xf]
      %v912 = vld [vmem:[%s5 + $0xa0] sm:$0xf]
      %v913 = vld [vmem:[%s5 + $0xa4] sm:$0xf]
      %v914 = vld [vmem:[%s5 + $0xa8] sm:$0xf]
      %v915 = vld [vmem:[%s5 + $0xac] sm:$0xf]
      %v916 = vld [vmem:[%s5 + $0xb0] sm:$0xf]
      %v917 = vld [vmem:[%s5 + $0xb4] sm:$0xf]
      %v918 = vld [vmem:[%s5 + $0xb8] sm:$0xf]
      %v919 = vld [vmem:[%s5 + $0xbc] sm:$0xf]
      %v920 = vld [vmem:[%s5 + $0xc0] sm:$0xf]
      %v921 = vld [vmem:[%s5 + $0xc4] sm:$0xf]
      %v922 = vld [vmem:[%s5 + $0xc8] sm:$0xf]
      %v923 = vld [vmem:[%s5 + $0xcc] sm:$0xf]
      %v924 = vld [vmem:[%s5 + $0xd0] sm:$0xf]
      %v925 = vld [vmem:[%s5 + $0xd4] sm:$0xf]
      %v926 = vld [vmem:[%s5 + $0xd8] sm:$0xf]
      %v927 = vld [vmem:[%s5 + $0xdc] sm:$0xf]
      %v928 = vld [vmem:[%s5 + $0xe0] sm:$0xf]
      %v929 = vld [vmem:[%s5 + $0xe4] sm:$0xf]
      %v930 = vld [vmem:[%s5 + $0xe8] sm:$0xf]
      %v931 = vld [vmem:[%s5 + $0xec] sm:$0xf]
      %v932 = vld [vmem:[%s5 + $0xf0] sm:$0xf]
      %v933 = vld [vmem:[%s5 + $0xf4] sm:$0xf]
      %v934 = vld [vmem:[%s5 + $0xf8] sm:$0xf]
      %v935 = vld [vmem:[%s5 + $0xfc] sm:$0xf]
      %v936 = vld [vmem:[%s6] sm:$0x1]
      %v938 = vlaneseq
      %v939 = vshrl.u32 %v938, 7
      %v940 = vsub.s32 0, %v939
      %v941 = vrot.slane %v936, %v940
      %v1007 = vunpack.c.l.b16 %v872
      %v1008 = vunpack.c.l.b16 %v873
      %v1009 = vunpack.c.l.b16 %v874
      %v1010 = vunpack.c.l.b16 %v875
      %v1011 = vunpack.c.l.b16 %v876
      %v1012 = vunpack.c.l.b16 %v877
      %v1013 = vunpack.c.l.b16 %v878
      %v1014 = vunpack.c.l.b16 %v879
      %v1015 = vunpack.c.l.b16 %v880
      %v1016 = vunpack.c.l.b16 %v881
      %v1017 = vunpack.c.l.b16 %v882
      %v1018 = vunpack.c.l.b16 %v883
      %v1019 = vunpack.c.l.b16 %v884
      %v1020 = vunpack.c.l.b16 %v885
      %v1021 = vunpack.c.l.b16 %v886
      %v1022 = vunpack.c.l.b16 %v887
      %v1023 = vunpack.c.l.b16 %v888
      %v1024 = vunpack.c.l.b16 %v889
      %v1025 = vunpack.c.l.b16 %v890
      %v1026 = vunpack.c.l.b16 %v891
      %v1027 = vunpack.c.l.b16 %v892
      %v1028 = vunpack.c.l.b16 %v893
      %v1029 = vunpack.c.l.b16 %v894
      %v1030 = vunpack.c.l.b16 %v895
      %v1031 = vunpack.c.l.b16 %v896
      %v1032 = vunpack.c.l.b16 %v897
      %v1033 = vunpack.c.l.b16 %v898
      %v1034 = vunpack.c.l.b16 %v899
      %v1035 = vunpack.c.l.b16 %v900
      %v1036 = vunpack.c.l.b16 %v901
      %v1037 = vunpack.c.l.b16 %v902
      %v1038 = vunpack.c.l.b16 %v903
      %v1039 = vunpack.c.l.b16 %v904
      %v1040 = vunpack.c.l.b16 %v905
      %v1041 = vunpack.c.l.b16 %v906
      %v1042 = vunpack.c.l.b16 %v907
      %v1043 = vunpack.c.l.b16 %v908
      %v1044 = vunpack.c.l.b16 %v909
      %v1045 = vunpack.c.l.b16 %v910
      %v1046 = vunpack.c.l.b16 %v911
      %v1047 = vunpack.c.l.b16 %v912
      %v1048 = vunpack.c.l.b16 %v913
      %v1049 = vunpack.c.l.b16 %v914
      %v1050 = vunpack.c.l.b16 %v915
      %v1051 = vunpack.c.l.b16 %v916
      %v1052 = vunpack.c.l.b16 %v917
      %v1053 = vunpack.c.l.b16 %v918
      %v1054 = vunpack.c.l.b16 %v919
      %v1055 = vunpack.c.l.b16 %v920
      %v1056 = vunpack.c.l.b16 %v921
      %v1057 = vunpack.c.l.b16 %v922
      %v1058 = vunpack.c.l.b16 %v923
      %v1059 = vunpack.c.l.b16 %v924
      %v1060 = vunpack.c.l.b16 %v925
      %v1061 = vunpack.c.l.b16 %v926
      %v1062 = vunpack.c.l.b16 %v927
      %v1063 = vunpack.c.l.b16 %v928
      %v1064 = vunpack.c.l.b16 %v929
      %v1065 = vunpack.c.l.b16 %v930
      %v1066 = vunpack.c.l.b16 %v931
      %v1067 = vunpack.c.l.b16 %v932
      %v1068 = vunpack.c.l.b16 %v933
      %v1069 = vunpack.c.l.b16 %v934
      %v1070 = vunpack.c.l.b16 %v935
      %v1071 = vpack.c.b16 %v1008, %v1007
      %v1072 = vpack.c.b16 %v1010, %v1009
      %v1073 = vpack.c.b16 %v1012, %v1011
      %v1074 = vpack.c.b16 %v1014, %v1013
      %v1075 = vpack.c.b16 %v1016, %v1015
      %v1076 = vpack.c.b16 %v1018, %v1017
      %v1077 = vpack.c.b16 %v1020, %v1019
      %v1078 = vpack.c.b16 %v1022, %v1021
      %v1079 = vpack.c.b16 %v1024, %v1023
      %v1080 = vpack.c.b16 %v1026, %v1025
      %v1081 = vpack.c.b16 %v1028, %v1027
      %v1082 = vpack.c.b16 %v1030, %v1029
      %v1083 = vpack.c.b16 %v1032, %v1031
      %v1084 = vpack.c.b16 %v1034, %v1033
      %v1085 = vpack.c.b16 %v1036, %v1035
      %v1086 = vpack.c.b16 %v1038, %v1037
      %v1087 = vpack.c.b16 %v1040, %v1039
      %v1088 = vpack.c.b16 %v1042, %v1041
      %v1089 = vpack.c.b16 %v1044, %v1043
      %v1090 = vpack.c.b16 %v1046, %v1045
      %v1091 = vpack.c.b16 %v1048, %v1047
      %v1092 = vpack.c.b16 %v1050, %v1049
      %v1093 = vpack.c.b16 %v1052, %v1051
      %v1094 = vpack.c.b16 %v1054, %v1053
      %v1095 = vpack.c.b16 %v1056, %v1055
      %v1096 = vpack.c.b16 %v1058, %v1057
      %v1097 = vpack.c.b16 %v1060, %v1059
      %v1098 = vpack.c.b16 %v1062, %v1061
      %v1099 = vpack.c.b16 %v1064, %v1063
      %v1100 = vpack.c.b16 %v1066, %v1065
      %v1101 = vpack.c.b16 %v1068, %v1067
      %v1102 = vpack.c.b16 %v1070, %v1069
      %1135 = vmatprep.subr.bf16.mxu0 0
      %1136 = vmatpush1.bf16.msra.mxu0 %v1071
      %1137 = vmatprep.subr.bf16.mxu0 0
      %1138 = vmatpush1.bf16.msra.mxu0 %v1072
      %1139 = vmatprep.subr.bf16.mxu0 0
      %1140 = vmatpush1.bf16.msra.mxu0 %v1073
      %1141 = vmatprep.subr.bf16.mxu0 0
      %1142 = vmatpush1.bf16.msra.mxu0 %v1074
      %1143 = vmatprep.subr.bf16.mxu0 0
      %1144 = vmatpush1.bf16.msra.mxu0 %v1075
      %1145 = vmatprep.subr.bf16.mxu0 0
      %1146 = vmatpush1.bf16.msra.mxu0 %v1076
      %1147 = vmatprep.subr.bf16.mxu0 0
      %1148 = vmatpush1.bf16.msra.mxu0 %v1077
      %1149 = vmatprep.subr.bf16.mxu0 0
      %1150 = vmatpush1.bf16.msra.mxu0 %v1078
      %1151 = vmatprep.subr.bf16.mxu0 0
      %1152 = vmatpush1.bf16.msra.mxu0 %v1079
      %1153 = vmatprep.subr.bf16.mxu0 0
      %1154 = vmatpush1.bf16.msra.mxu0 %v1080
      %1155 = vmatprep.subr.bf16.mxu0 0
      %1156 = vmatpush1.bf16.msra.mxu0 %v1081
      %1157 = vmatprep.subr.bf16.mxu0 0
      %1158 = vmatpush1.bf16.msra.mxu0 %v1082
      %1159 = vmatprep.subr.bf16.mxu0 0
      %1160 = vmatpush1.bf16.msra.mxu0 %v1083
      %1161 = vmatprep.subr.bf16.mxu0 0
      %1162 = vmatpush1.bf16.msra.mxu0 %v1084
      %1163 = vmatprep.subr.bf16.mxu0 0
      %1164 = vmatpush1.bf16.msra.mxu0 %v1085
      %1165 = vmatprep.subr.bf16.mxu0 0
      %1166 = vmatpush1.bf16.msra.mxu0 %v1086
      %1167 = vmatprep.mubr.bf16.mxu0 %v869
      %1168 = vmatmul.mubr.bf16.gmra.mrb[0].mxu0 %v868
      %v1169 = vpop.f32.mrb[0].mxu0
      %v1170 = vadd.f32 %v941, %v1169
      %v1171 = vpop.f32.mrb[0].mxu0
      %v1172 = vpop.f32.mrb[0].mxu0
      %v1173 = vadd.f32 %v941, %v1172
      %v1174 = vpop.f32.mrb[0].mxu0
      %1175 = vdwg.mxu0
      %1176 = vmatprep.subr.bf16.mxu0 0
      %1177 = vmatpush1.bf16.msra.mxu0 %v1087
      %1178 = vmatprep.subr.bf16.mxu0 0
      %1179 = vmatpush1.bf16.msra.mxu0 %v1088
      %1180 = vmatprep.subr.bf16.mxu0 0
      %1181 = vmatpush1.bf16.msra.mxu0 %v1089
      %1182 = vmatprep.subr.bf16.mxu0 0
      %1183 = vmatpush1.bf16.msra.mxu0 %v1090
      %1184 = vmatprep.subr.bf16.mxu0 0
      %1185 = vmatpush1.bf16.msra.mxu0 %v1091
      %1186 = vmatprep.subr.bf16.mxu0 0
      %1187 = vmatpush1.bf16.msra.mxu0 %v1092
      %1188 = vmatprep.subr.bf16.mxu0 0
      %1189 = vmatpush1.bf16.msra.mxu0 %v1093
      %1190 = vmatprep.subr.bf16.mxu0 0
      %1191 = vmatpush1.bf16.msra.mxu0 %v1094
      %1192 = vmatprep.subr.bf16.mxu0 0
      %1193 = vmatpush1.bf16.msra.mxu0 %v1095
      %1194 = vmatprep.subr.bf16.mxu0 0
      %1195 = vmatpush1.bf16.msra.mxu0 %v1096
      %1196 = vmatprep.subr.bf16.mxu0 0
      %1197 = vmatpush1.bf16.msra.mxu0 %v1097
      %1198 = vmatprep.subr.bf16.mxu0 0
      %1199 = vmatpush1.bf16.msra.mxu0 %v1098
      %1200 = vmatprep.subr.bf16.mxu0 0
      %1201 = vmatpush1.bf16.msra.mxu0 %v1099
      %1202 = vmatprep.subr.bf16.mxu0 0
      %1203 = vmatpush1.bf16.msra.mxu0 %v1100
      %1204 = vmatprep.subr.bf16.mxu0 0
      %1205 = vmatpush1.bf16.msra.mxu0 %v1101
      %1206 = vmatprep.subr.bf16.mxu0 0
      %1207 = vmatpush1.bf16.msra.mxu0 %v1102
      %1208 = vmatprep.mubr.bf16.mxu0 %v871
      %1209 = vmatmul.mubr.bf16.gmra.mrb[0].mxu0 %v870
      %v1210 = vpop.f32.mrb[0].mxu0
      %v1211 = vadd.f32 %v1170, %v1210
      %v1212 = vpop.f32.mrb[0].mxu0
      %v1213 = vpop.f32.mrb[0].mxu0
      %v1214 = vadd.f32 %v1173, %v1213
      %v1215 = vpop.f32.mrb[0].mxu0
      %1216 = vdwg.mxu0
      %v1217 = vmax.f32 %v1211, 0.0
      %v1218 = vmax.f32 %v1214, 0.0
      %v1219 = vpack.c.bf16 %v1218, %v1217
      %v1220 = vld [vmem:[%s7] sm:$0xf]
      %v1221 = vld [vmem:[%s7 + $0x4] sm:$0xf]
      %v1222 = vld [vmem:[%s7 + $0x8] sm:$0xf]
      %v1223 = vld [vmem:[%s7 + $0xc] sm:$0xf]
      %v1224 = vld [vmem:[%s7 + $0x10] sm:$0xf]
      %v1225 = vld [vmem:[%s7 + $0x14] sm:$0xf]
      %v1226 = vld [vmem:[%s7 + $0x18] sm:$0xf]
      %v1227 = vld [vmem:[%s7 + $0x1c] sm:$0xf]
      %s1228 = sld [smem:[#allocation2]]
      %v1229 = vstv %s1228
      %v1238 = vunpack.c.l.b16 %v1220
      %v1239 = vunpack.c.l.b16 %v1221
      %v1240 = vunpack.c.l.b16 %v1222
      %v1241 = vunpack.c.l.b16 %v1223
      %v1242 = vunpack.c.l.b16 %v1224
      %v1243 = vunpack.c.l.b16 %v1225
      %v1244 = vunpack.c.l.b16 %v1226
      %v1245 = vunpack.c.l.b16 %v1227
      %v1246 = vpack.c.b16 %v1239, %v1238
      %v1247 = vpack.c.b16 %v1241, %v1240
      %v1248 = vpack.c.b16 %v1243, %v1242
      %v1249 = vpack.c.b16 %v1245, %v1244
      %v1255 = vsel %vm494, %v1219, 0
      %1257 = vmatprep.subr.bf16.mxu0 0
      %1258 = vmatpush1.bf16.msra.mxu0 %v1246
      %1259 = vmatprep.subr.bf16.mxu0 0
      %1260 = vmatpush1.bf16.msra.mxu0 %v1247
      %1261 = vmatprep.subr.bf16.mxu0 0
      %1262 = vmatpush1.bf16.msra.mxu0 %v1248
      %1263 = vmatprep.subr.bf16.mxu0 0
      %1264 = vmatpush1.bf16.msra.mxu0 %v1249
      %1265 = vmatprep.subr.bf16.mxu0 0
      %1266 = vmatpush1.bf16.msra.mxu0 0
      %1267 = vmatprep.subr.bf16.mxu0 0
      %1268 = vmatpush1.bf16.msra.mxu0 0
      %1269 = vmatprep.subr.bf16.mxu0 0
      %1270 = vmatpush1.bf16.msra.mxu0 0
      %1271 = vmatprep.subr.bf16.mxu0 0
      %1272 = vmatpush1.bf16.msra.mxu0 0
      %1273 = vmatprep.subr.bf16.mxu0 0
      %1274 = vmatpush1.bf16.msra.mxu0 0
      %1275 = vmatprep.subr.bf16.mxu0 0
      %1276 = vmatpush1.bf16.msra.mxu0 0
      %1277 = vmatprep.subr.bf16.mxu0 0
      %1278 = vmatpush1.bf16.msra.mxu0 0
      %1279 = vmatprep.subr.bf16.mxu0 0
      %1280 = vmatpush1.bf16.msra.mxu0 0
      %1281 = vmatprep.subr.bf16.mxu0 0
      %1282 = vmatpush1.bf16.msra.mxu0 0
      %1283 = vmatprep.subr.bf16.mxu0 0
      %1284 = vmatpush1.bf16.msra.mxu0 0
      %1285 = vmatprep.subr.bf16.mxu0 0
      %1286 = vmatpush1.bf16.msra.mxu0 0
      %1287 = vmatprep.subr.bf16.mxu0 0
      %1288 = vmatpush1.bf16.msra.mxu0 0
      %1289 = vmatprep.mubr.bf16.mxu0 0
      %1290 = vmatmul.mubr.bf16.gmra.mrb[0].mxu0 %v1255
      %v1291 = vpop.f32.mrb[0].mxu0
      %v1292 = vadd.f32 %v1229, %v1291
      %v1293 = vpop.f32.mrb[0].mxu0
      %v1294 = vpop.f32.mrb[0].mxu0
      %v1295 = vadd.f32 %v1229, %v1294
      %v1296 = vpop.f32.mrb[0].mxu0
      %1297 = vdwg.mxu0
      %vm1298 = vcmask 64512
      %1299 = vst.msk [vmem:[%s357] sm:$0xff] %vm1298, %v1292
      %1300 = vst.msk [vmem:[%s357 + $0x8] sm:$0xff] %vm1298, %v1295
      %s1301 = smul.u32 2, %s21
      %p1302 = scmp.lt.s32.totalorder %s1301, 3
      %s1303 = scalar_select %p1302, %s1301, 3
      %s1304 = smul.addr %s1303, 8
      %s1305 = scalar_lea.vmem %s9, %s1304
      // Predicated region
      $region57: #{reward_model_forward.1} parent=55 // pred_check
        %p1306 = pneg %p238
      $region58: #{reward_model_forward.1} parent=55 // pred_check_branch
        %1308 = sbr.rel (%p1306) target = $region60
      $region59: #{reward_model_forward.1} parent=55 // pred_region
        %s1309 = smul.u32 2, %s21
      $region60: #{reward_model_forward.1} parent=55 // pred_fallthru
        _
    $region56: #{reward_model_forward.1} parent=5 // pred_fallthru
      _
    %p1310 = scmp.le.s32.totalorder 2, %s16
    // Predicated region
    $region61: #{reward_model_forward.1} parent=5 // pred_check
      %p1311 = pneg %p1310
    $region62: #{reward_model_forward.1} parent=5 // pred_check_branch
      %1313 = sbr.rel (%p1311) target = $region64
    $region63: #{reward_model_forward.1} parent=5 // pred_region
      %s1314 = ssub.s32 %s16, 2
      // Predicated region
      $region65: #{reward_model_forward.1} parent=63 // pred_check
        %p1315 = pneg %p244
      $region66: #{reward_model_forward.1} parent=63 // pred_check_branch
        %1317 = sbr.rel (%p1315) target = $region68
      $region67: #{reward_model_forward.1} parent=63 // pred_region
        %s1318 = smul.u32 2, %s22
        %p1319 = scmp.lt.s32.totalorder %s1318, 3
        %s1320 = scalar_select %p1319, %s1318, 3
        %s1321 = smul.addr %s1320, 8
        %s1322 = scalar_lea.vmem %s9, %s1321
      $region68: #{reward_model_forward.1} parent=63 // pred_fallthru
        _
    $region64: #{reward_model_forward.1} parent=5 // pred_fallthru
      _
  $region6: #{reward_model_forward.1} parent=0 // loop_footer
    %s20 = sadd.s32 1, %s16
  $region7: #{reward_model_forward.1} parent=0 // loop_footer_branch
    %15 = sbr.rel target = $region3
  $region8: #{reward_model_forward.1} parent=0 // loop_exit
    _

</llo_original>
